<compile_context>
chip_gen: v6e
topology: v6e:2x2x1
jax: 0.10.0
libtpu: 0.0.40
codegen_flags: <defaults>
</compile_context>

<pallas_src>
import jax
import jax.numpy as jnp
from jax.experimental import pallas as pl
from jax.experimental.pallas import tpu as pltpu


def _outconv_kernel(x_ref, w_ref, b_ref, o_ref):
    # x_ref : (bn, C_in, tn)   spatial tile of bn batch elements (lane-dense)
    # w_ref : (C_out, C_in)    full weight matrix (kernel_size=1), VMEM resident
    # b_ref : (C_out, 1)       bias column, broadcasts along lanes
    # o_ref : (bn, C_out, tn)
    w = w_ref[...]
    b = b_ref[...]
    bn = x_ref.shape[0]
    for i in range(bn):  # bn is a small static int -> fully unrolled
        acc = jnp.dot(w, x_ref[i], preferred_element_type=jnp.float32)
        o_ref[i] = (acc + b).astype(o_ref.dtype)


def _vmem_capacity_bytes():
    try:
        return int(pltpu.get_tpu_info().vmem_capacity_bytes)
    except Exception:
        return 64 * 1024 * 1024  # conservative fallback (v7x per-TC physical)


def _largest_divisor_leq(x, cap):
    cap = max(1, min(x, cap))
    for d in range(cap, 0, -1):
        if x % d == 0:
            return d
    return 1


def _pick_tiles(n, hw_padded, c_in, c_out, itemsize, budget_bytes):
    """Choose (bn, tn): batch-block and lane-tile sizes.

    tn is the largest multiple of 128 that divides hw_padded and fits the
    double-buffered x+out VMEM budget.  bn (>1) is only used when the whole
    spatial extent fits in one tile, to amortize per-grid-step overhead.
    """
    per_lane = 2 * (c_in + c_out) * itemsize           # double-buffered x + out
    max_lanes = max(128, (budget_bytes // per_lane) // 128 * 128)

    tn = min(hw_padded, max_lanes)
    while hw_padded % tn != 0:                          # both are multiples of 128
        tn -= 128

    bn = 1
    if tn == hw_padded:
        lane_target = min(max_lanes, 8192)
        bn = _largest_divisor_leq(n, max(1, lane_target // tn))
    return bn, tn


def outconv_forward(x_nchw, weight, bias):
    """1x1 Conv2d forward (nn.Conv2d(in, out, kernel_size=1)).

    x_nchw : (N, C_in, H, W)
    weight : (C_out, C_in, 1, 1)   -- PyTorch Conv2d layout
    bias   : (C_out,)
    returns: (N, C_out, H, W)
    """
    N, C_in, H, W = x_nchw.shape
    C_out = weight.shape[0]
    HW = H * W

    # Free reshapes only: NCHW -> (N, C_in, H*W).
    x3 = x_nchw.reshape(N, C_in, HW)
    w_mat = weight.reshape(C_out, C_in)
    b_col = bias.reshape(C_out, 1)

    itemsize = jnp.dtype(x_nchw.dtype).itemsize

    # One-time pad to a multiple of 128 lanes so every block is full-width
    # (unmasked stores, pipelining preserved, no VMEM cliff for odd shapes).
    hw_padded = ((HW + 127) // 128) * 128
    if hw_padded != HW:
        x3 = jnp.pad(x3, ((0, 0), (0, 0), (0, hw_padded - HW)))

    cap = _vmem_capacity_bytes()
    budget = int(cap * 0.4)                 # buffer budget with ~60% headroom
    bn, tn = _pick_tiles(N, hw_padded, C_in, C_out, itemsize, budget)

    buf_bytes = 2 * bn * tn * (C_in + C_out) * itemsize       # double-buffered x+out
    param_bytes = (C_out * C_in + C_out) * jnp.dtype(weight.dtype).itemsize
    vmem_limit = int(min(cap * 0.75,
                         max(buf_bytes + param_bytes + (8 << 20), 32 << 20)))

    # Spatial axis FIRST so megacore (v7x) shards the large axis even if N==1.
    grid = (hw_padded // tn, N // bn)

    out3 = pl.pallas_call(
        _outconv_kernel,
        out_shape=jax.ShapeDtypeStruct((N, C_out, hw_padded), x_nchw.dtype),
        grid_spec=pltpu.PrefetchScalarGridSpec(
            num_scalar_prefetch=0,
            grid=grid,
            in_specs=[
                pl.BlockSpec((bn, C_in, tn), lambda j, n: (n, 0, j)),
                pl.BlockSpec((C_out, C_in), lambda j, n: (0, 0)),
                pl.BlockSpec((C_out, 1), lambda j, n: (0, 0)),
            ],
            out_specs=pl.BlockSpec((bn, C_out, tn), lambda j, n: (n, 0, j)),
        ),
        compiler_params=pltpu.CompilerParams(
            dimension_semantics=("parallel", "parallel"),
            vmem_limit_bytes=vmem_limit),
    )(x3, w_mat, b_col)

    if hw_padded != HW:
        out3 = out3[:, :, :HW]
    return out3.reshape(N, C_out, H, W)


def reference_forward(x_nchw, weight, bias):
    # Pure-JAX reference of nn.Conv2d(kernel_size=1).
    w = weight.reshape(weight.shape[0], weight.shape[1])  # (C_out, C_in)
    out = jnp.einsum("nchw,oc->nohw", x_nchw, w) + bias[None, :, None, None]
    return out.astype(x_nchw.dtype)


if __name__ == "__main__":
    key = jax.random.PRNGKey(0)
    k_x, k_w, k_b, k_x2 = jax.random.split(key, 4)

    N, C_in, C_out, H, W = 2, 4, 3, 16, 16

    x = jax.random.normal(k_x, (N, C_in, H, W), dtype=jnp.float32)
    # Deterministic synthetic Conv2d parameters: (C_out, C_in, 1, 1), (C_out,)
    bound = 1.0 / (C_in ** 0.5)
    weight = jax.random.uniform(k_w, (C_out, C_in, 1, 1),
                                minval=-bound, maxval=bound, dtype=jnp.float32)
    bias = jax.random.uniform(k_b, (C_out,),
                              minval=-bound, maxval=bound, dtype=jnp.float32)

    out = jax.block_until_ready(outconv_forward(x, weight, bias))
    ref = reference_forward(x, weight, bias)
    assert out.shape == (N, C_out, H, W), out.shape
    assert jnp.allclose(out, ref, atol=1e-5, rtol=1e-5), "mismatch vs reference"

    # Also exercise the non-128-aligned spatial path (HW=25 -> padded to 128).
    x2 = jax.random.normal(k_x2, (N, C_in, 5, 5), dtype=jnp.float32)
    out2 = jax.block_until_ready(outconv_forward(x2, weight, bias))
    ref2 = reference_forward(x2, weight, bias)
    assert out2.shape == (N, C_out, 5, 5), out2.shape
    assert jnp.allclose(out2, ref2, atol=1e-5, rtol=1e-5), "mismatch (padded path)"

    print("KERNEL_OK")
</pallas_src>

<mosaic_0001>
module attributes {stable_mosaic.version = 11 : i64} {
  func.func @_outconv_kernel(%arg0: i32, %arg1: i32, %arg2: memref<2x4x256xf32, #tpu.memory_space<vmem>>, %arg3: memref<3x4xf32, #tpu.memory_space<vmem>>, %arg4: memref<3x1xf32, #tpu.memory_space<vmem>>, %arg5: memref<2x3x256xf32, #tpu.memory_space<vmem>>) attributes {dimension_semantics = [#tpu.dimension_semantics<parallel>, #tpu.dimension_semantics<parallel>], iteration_bounds = array<i64: 1, 1>, scalar_prefetch = 0 : i64, scratch_operands = 0 : i64, tpu.core_type = #tpu.core_type<tc>, window_params = [{transform_indices = @transform_0, window_bounds = array<i64: 2, 4, 256>}, {pipeline_mode = #tpu.pipeline_mode<synchronous>, transform_indices = @transform_1, window_bounds = array<i64: 3, 4>}, {pipeline_mode = #tpu.pipeline_mode<synchronous>, transform_indices = @transform_2, window_bounds = array<i64: 3, 1>}, {transform_indices = @transform_3, window_bounds = array<i64: 2, 3, 256>}]} {
    %c0 = arith.constant 0 : index
    %c0_0 = arith.constant 0 : index
    %0 = vector.load %arg3[%c0, %c0_0] : memref<3x4xf32, #tpu.memory_space<vmem>>, vector<3x4xf32>
    %c0_1 = arith.constant 0 : index
    %c0_2 = arith.constant 0 : index
    %1 = vector.load %arg4[%c0_1, %c0_2] : memref<3x1xf32, #tpu.memory_space<vmem>>, vector<3x1xf32>
    %c0_3 = arith.constant 0 : index
    %c0_4 = arith.constant 0 : index
    %c0_5 = arith.constant 0 : index
    %2 = vector.load %arg2[%c0_3, %c0_4, %c0_5] : memref<2x4x256xf32, #tpu.memory_space<vmem>>, vector<1x4x256xf32>
    %3 = vector.shape_cast %2 : vector<1x4x256xf32> to vector<4x256xf32>
    %cst = arith.constant dense<0.000000e+00> : vector<3x256xf32>
    %4 = tpu.matmul %0, %3, %cst {dimension_numbers = #tpu.dot_dimension_numbers<[1], [0], [0], [1], [0, 0, 1, 1], [], []>} : vector<3x4xf32>, vector<4x256xf32>, vector<3x256xf32> -> vector<3x256xf32>
    %5 = vector.broadcast %1 : vector<3x1xf32> to vector<3x256xf32>
    %6 = arith.addf %4, %5 : vector<3x256xf32>
    %c0_6 = arith.constant 0 : index
    %c0_7 = arith.constant 0 : index
    %c0_8 = arith.constant 0 : index
    %7 = vector.load %arg5[%c0_6, %c0_7, %c0_8] : memref<2x3x256xf32, #tpu.memory_space<vmem>>, vector<1x3x256xf32>
    %8 = vector.shape_cast %7 : vector<1x3x256xf32> to vector<3x256xf32>
    %9 = vector.shape_cast %6 : vector<3x256xf32> to vector<1x3x256xf32>
    tpu.vector_store %arg5[%c0_6, %c0_7, %c0_8], %9 {strides = array<i32>} : memref<2x3x256xf32, #tpu.memory_space<vmem>>, vector<1x3x256xf32>,
    %c1 = arith.constant 1 : index
    %c0_9 = arith.constant 0 : index
    %c0_10 = arith.constant 0 : index
    %10 = vector.load %arg2[%c1, %c0_9, %c0_10] : memref<2x4x256xf32, #tpu.memory_space<vmem>>, vector<1x4x256xf32>
    %11 = vector.shape_cast %10 : vector<1x4x256xf32> to vector<4x256xf32>
    %cst_11 = arith.constant dense<0.000000e+00> : vector<3x256xf32>
    %12 = tpu.matmul %0, %11, %cst_11 {dimension_numbers = #tpu.dot_dimension_numbers<[1], [0], [0], [1], [0, 0, 1, 1], [], []>} : vector<3x4xf32>, vector<4x256xf32>, vector<3x256xf32> -> vector<3x256xf32>
    %13 = vector.broadcast %1 : vector<3x1xf32> to vector<3x256xf32>
    %14 = arith.addf %12, %13 : vector<3x256xf32>
    %c1_12 = arith.constant 1 : index
    %c0_13 = arith.constant 0 : index
    %c0_14 = arith.constant 0 : index
    %15 = vector.load %arg5[%c1_12, %c0_13, %c0_14] : memref<2x3x256xf32, #tpu.memory_space<vmem>>, vector<1x3x256xf32>
    %16 = vector.shape_cast %15 : vector<1x3x256xf32> to vector<3x256xf32>
    %17 = vector.shape_cast %14 : vector<3x256xf32> to vector<1x3x256xf32>
    tpu.vector_store %arg5[%c1_12, %c0_13, %c0_14], %17 {strides = array<i32>} : memref<2x3x256xf32, #tpu.memory_space<vmem>>, vector<1x3x256xf32>,
    return
  }
  func.func @transform_0(%arg0: i32, %arg1: i32) -> (i32, i32, i32) {
    %c0_i32 = arith.constant 0 : i32
    %c0_i32_0 = arith.constant 0 : i32
    return %arg1, %c0_i32, %arg0 : i32, i32, i32
  }
  func.func @transform_1(%arg0: i32, %arg1: i32) -> (i32, i32) {
    %c0_i32 = arith.constant 0 : i32
    %c0_i32_0 = arith.constant 0 : i32
    %c0_i32_1 = arith.constant 0 : i32
    return %c0_i32, %c0_i32_0 : i32, i32
  }
  func.func @transform_2(%arg0: i32, %arg1: i32) -> (i32, i32) {
    %c0_i32 = arith.constant 0 : i32
    %c0_i32_0 = arith.constant 0 : i32
    %c0_i32_1 = arith.constant 0 : i32
    return %c0_i32, %c0_i32_0 : i32, i32
  }
  func.func @transform_3(%arg0: i32, %arg1: i32) -> (i32, i32, i32) {
    %c0_i32 = arith.constant 0 : i32
    %c0_i32_0 = arith.constant 0 : i32
    return %arg1, %c0_i32, %arg0 : i32, i32, i32
  }
}

</mosaic_0001>

<llo_original>
// kernel: tpu_custom_call.1
$region0: #{tpu_custom_call.1}
  #allocation0 [shape = 'u32[]', space=smem, size = 0x4, offset = 0x4, fixed_abs, tag = 'smem constant byte address 0x4 - core index']
  #allocation1 [shape = 'u32[144,128]{1,0:T(1,128)}', space=vmem, size = 0x12000, scoped, tag = 'internal scratch']
  %s0 = inlined_call_operand.hbm [shape: f32[2,4,256], index: 0, kind: input, shape index: {}]
  %s1 = inlined_call_operand.vmem [shape: f32[3,4], index: 1, kind: input, shape index: {}]
  %s2 = inlined_call_operand.vmem [shape: f32[3,1], index: 2, kind: input, shape index: {}]
  %s3 = inlined_call_operand.vmem [shape: f32[2,3,256], index: 3, kind: output, shape index: {}]
  %s4 = sld [smem:[#allocation0]]
  $region26: #{tpu_custom_call.1} parent=0
    _
  %s6 = ssub.s32 1, %s4
  %s7 = scalar_select 0, %s6, %s4
  $region1: #{tpu_custom_call.1} parent=0
    #allocation2 [shape = 'u8[8192]{0}', space=vmem, size = 0x2000, scoped, tag = 'input window, operand 0, single buffered']
    #allocation3 [shape = 's32[1]{0}', space=sflag, size = 0x4, scoped, tag = 'scoped memory for tpu_custom_call.1']
    %8 = vsyncpa [#allocation3], 0
    // Predicated region
    $region2: #{tpu_custom_call.1} parent=1 // pred_check
      _
    $region3: #{tpu_custom_call.1} parent=1 // pred_check_branch
      %10 = sbr.rel (0) target = $region5
    $region4: #{tpu_custom_call.1} parent=1 // pred_region
      %s12 = ssub.s32 256, 256
      %13 = vsyncadd [#allocation3], %s12
      %s14 = sshll.u32 [#allocation2], 4
      %s15 = int_to_ptr.vmem [resolvable:$true] %s14
      %20 = dma.hbm_to_vmem [thread:$0]  %s0, 256, %s15, [#allocation3], 128, 128, 8
    $region5: #{tpu_custom_call.1} parent=1 // pred_fallthru
      _
    // Predicated region
    $region6: #{tpu_custom_call.1} parent=1 // pred_check
      _
    $region7: #{tpu_custom_call.1} parent=1 // pred_check_branch
      %22 = sbr.rel (0) target = $region9
    $region8: #{tpu_custom_call.1} parent=1 // pred_region
      _
    $region9: #{tpu_custom_call.1} parent=1 // pred_fallthru
      _
    // Predicated region
    $region10: #{tpu_custom_call.1} parent=1 // pred_check
      _
    $region11: #{tpu_custom_call.1} parent=1 // pred_check_branch
      %24 = sbr.rel (0) target = $region13
    $region12: #{tpu_custom_call.1} parent=1 // pred_region
      _
    $region13: #{tpu_custom_call.1} parent=1 // pred_fallthru
      _
    // Predicated region
    $region14: #{tpu_custom_call.1} parent=1 // pred_check
      _
    $region15: #{tpu_custom_call.1} parent=1 // pred_check_branch
      %26 = sbr.rel (0) target = $region17
    $region16: #{tpu_custom_call.1} parent=1 // pred_region
      %27 = dma.done [#allocation3], 256
    $region17: #{tpu_custom_call.1} parent=1 // pred_fallthru
      _
    %v28 = vld [vmem:[%s1] sm:$0x7]
    %v29 = vld [vmem:[%s2] sm:$0x7]
    %v30 = vld [vmem:[#allocation2] sm:$0xff]
    %32 = vset.pattern.permute.xlu0 0
    %33 = vperm.xlu0 %32, %v29
    %v34 = vpop.permute.xlu0 %33
    %v37 = vcombine.high %v30, %v30
    %vm38 = vcmask 31744
    %v40 = vsel %vm38, %v28, 0
    %vm42 = vcmask 1043456
    %v43 = vsel %vm42, %v30, 0
    %v45 = vsel %vm42, %v37, 0
    %47 = vmatprep.subr.mxu0 0.0
    %48 = vmatpush1.msra.mxu0 0.0
    %49 = vmatprep.subr.mxu0 0.0
    %50 = vmatpush1.msra.mxu0 0.0
    %51 = vmatprep.subr.mxu0 0.0
    %52 = vmatpush1.msra.mxu0 0.0
    %53 = vmatprep.subr.mxu0 0.0
    %54 = vmatpush1.msra.mxu0 0.0
    %55 = vmatprep.subr.mxu0 0.0
    %56 = vmatpush1.msra.mxu0 0.0
    %57 = vmatprep.subr.mxu0 0.0
    %58 = vmatpush1.msra.mxu0 0.0
    %59 = vmatprep.subr.mxu0 0.0
    %60 = vmatpush1.msra.mxu0 0.0
    %61 = vmatprep.subr.mxu0 0.0
    %62 = vmatpush1.msra.mxu0 0.0
    %63 = vmatprep.subr.mxu0 0.0
    %64 = vmatpush1.msra.mxu0 0.0
    %65 = vmatprep.subr.mxu0 0.0
    %66 = vmatpush1.msra.mxu0 0.0
    %67 = vmatprep.subr.mxu0 0.0
    %68 = vmatpush1.msra.mxu0 0.0
    %69 = vmatprep.subr.mxu0 0.0
    %70 = vmatpush1.msra.mxu0 0.0
    %71 = vmatprep.subr.mxu0 0.0
    %72 = vmatpush1.msra.mxu0 0.0
    %73 = vmatprep.subr.mxu0 0.0
    %74 = vmatpush1.msra.mxu0 0.0
    %75 = vmatprep.subr.mxu0 0.0
    %76 = vmatpush1.msra.mxu0 0.0
    %77 = vmatprep.subr.mxu0 %v45
    %78 = vmatpush1.msra.mxu0 %v43
    %79 = vmatprep.subr.mxu0 0.0
    %80 = vmatpush2.msra.mxu0 0.0
    %81 = vmatprep.subr.mxu0 0.0
    %82 = vmatpush2.msra.mxu0 0.0
    %83 = vmatprep.subr.mxu0 0.0
    %84 = vmatpush2.msra.mxu0 0.0
    %85 = vmatprep.subr.mxu0 0.0
    %86 = vmatpush2.msra.mxu0 0.0
    %87 = vmatprep.subr.mxu0 0.0
    %88 = vmatpush2.msra.mxu0 0.0
    %89 = vmatprep.subr.mxu0 0.0
    %90 = vmatpush2.msra.mxu0 0.0
    %91 = vmatprep.subr.mxu0 0.0
    %92 = vmatpush2.msra.mxu0 0.0
    %93 = vmatprep.subr.mxu0 0.0
    %94 = vmatpush2.msra.mxu0 0.0
    %95 = vmatprep.subr.mxu0 0.0
    %96 = vmatpush2.msra.mxu0 0.0
    %97 = vmatprep.subr.mxu0 0.0
    %98 = vmatpush2.msra.mxu0 0.0
    %99 = vmatprep.subr.mxu0 0.0
    %100 = vmatpush2.msra.mxu0 0.0
    %101 = vmatprep.subr.mxu0 0.0
    %102 = vmatpush2.msra.mxu0 0.0
    %103 = vmatprep.subr.mxu0 0.0
    %104 = vmatpush2.msra.mxu0 0.0
    %105 = vmatprep.subr.mxu0 0.0
    %106 = vmatpush2.msra.mxu0 0.0
    %107 = vmatprep.subr.mxu0 0.0
    %108 = vmatpush2.msra.mxu0 0.0
    %109 = vmatprep.subr.mxu0 0.0
    %110 = vmatpush2.msra.mxu0 0.0
    %111 = vmatprep.mubr.f32.mxu0 0.0
    %112 = vmatmul.mubr.f32.gmra.mxu0 %v40
    %v113 = vpop.f32.mrf.mxu0
    %v114 = vadd.f32 %v34, %v113
    %v115 = vpop.f32.mrf.mxu0
    %v116 = vadd.f32 %v34, %v115
    %117 = vdwg.mxu0
    %v120 = vcombine.low %v114, %v116
    %122 = vst [vmem:[%s3] sm:$0x77] %v120
    %s123 = scalar_lea.vmem [#allocation2], 8
    %v124 = vld [vmem:[%s123] sm:$0xff]
    %v126 = vcombine.high %v124, %v124
    %v127 = vsel %vm42, %v124, 0
    %v129 = vsel %vm42, %v126, 0
    %131 = vmatprep.subr.mxu0 0.0
    %132 = vmatpush1.msra.mxu0 0.0
    %133 = vmatprep.subr.mxu0 0.0
    %134 = vmatpush1.msra.mxu0 0.0
    %135 = vmatprep.subr.mxu0 0.0
    %136 = vmatpush1.msra.mxu0 0.0
    %137 = vmatprep.subr.mxu0 0.0
    %138 = vmatpush1.msra.mxu0 0.0
    %139 = vmatprep.subr.mxu0 0.0
    %140 = vmatpush1.msra.mxu0 0.0
    %141 = vmatprep.subr.mxu0 0.0
    %142 = vmatpush1.msra.mxu0 0.0
    %143 = vmatprep.subr.mxu0 0.0
    %144 = vmatpush1.msra.mxu0 0.0
    %145 = vmatprep.subr.mxu0 0.0
    %146 = vmatpush1.msra.mxu0 0.0
    %147 = vmatprep.subr.mxu0 0.0
    %148 = vmatpush1.msra.mxu0 0.0
    %149 = vmatprep.subr.mxu0 0.0
    %150 = vmatpush1.msra.mxu0 0.0
    %151 = vmatprep.subr.mxu0 0.0
    %152 = vmatpush1.msra.mxu0 0.0
    %153 = vmatprep.subr.mxu0 0.0
    %154 = vmatpush1.msra.mxu0 0.0
    %155 = vmatprep.subr.mxu0 0.0
    %156 = vmatpush1.msra.mxu0 0.0
    %157 = vmatprep.subr.mxu0 0.0
    %158 = vmatpush1.msra.mxu0 0.0
    %159 = vmatprep.subr.mxu0 0.0
    %160 = vmatpush1.msra.mxu0 0.0
    %161 = vmatprep.subr.mxu0 %v129
    %162 = vmatpush1.msra.mxu0 %v127
    %163 = vmatprep.subr.mxu0 0.0
    %164 = vmatpush2.msra.mxu0 0.0
    %165 = vmatprep.subr.mxu0 0.0
    %166 = vmatpush2.msra.mxu0 0.0
    %167 = vmatprep.subr.mxu0 0.0
    %168 = vmatpush2.msra.mxu0 0.0
    %169 = vmatprep.subr.mxu0 0.0
    %170 = vmatpush2.msra.mxu0 0.0
    %171 = vmatprep.subr.mxu0 0.0
    %172 = vmatpush2.msra.mxu0 0.0
    %173 = vmatprep.subr.mxu0 0.0
    %174 = vmatpush2.msra.mxu0 0.0
    %175 = vmatprep.subr.mxu0 0.0
    %176 = vmatpush2.msra.mxu0 0.0
    %177 = vmatprep.subr.mxu0 0.0
    %178 = vmatpush2.msra.mxu0 0.0
    %179 = vmatprep.subr.mxu0 0.0
    %180 = vmatpush2.msra.mxu0 0.0
    %181 = vmatprep.subr.mxu0 0.0
    %182 = vmatpush2.msra.mxu0 0.0
    %183 = vmatprep.subr.mxu0 0.0
    %184 = vmatpush2.msra.mxu0 0.0
    %185 = vmatprep.subr.mxu0 0.0
    %186 = vmatpush2.msra.mxu0 0.0
    %187 = vmatprep.subr.mxu0 0.0
    %188 = vmatpush2.msra.mxu0 0.0
    %189 = vmatprep.subr.mxu0 0.0
    %190 = vmatpush2.msra.mxu0 0.0
    %191 = vmatprep.subr.mxu0 0.0
    %192 = vmatpush2.msra.mxu0 0.0
    %193 = vmatprep.subr.mxu0 0.0
    %194 = vmatpush2.msra.mxu0 0.0
    %195 = vmatprep.mubr.f32.mxu0 0.0
    %196 = vmatmul.mubr.f32.gmra.mxu0 %v40
    %v197 = vpop.f32.mrf.mxu0
    %v198 = vadd.f32 %v34, %v197
    %v199 = vpop.f32.mrf.mxu0
    %v200 = vadd.f32 %v34, %v199
    %201 = vdwg.mxu0
    %v204 = vcombine.low %v198, %v200
    %s206 = scalar_lea.vmem %s3, 8
    %207 = vst [vmem:[%s206] sm:$0x77] %v204
    // Predicated region
    $region18: #{tpu_custom_call.1} parent=1 // pred_check
      _
    $region19: #{tpu_custom_call.1} parent=1 // pred_check_branch
      %209 = sbr.rel (0) target = $region21
    $region20: #{tpu_custom_call.1} parent=1 // pred_region
      _
    $region21: #{tpu_custom_call.1} parent=1 // pred_fallthru
      _
    // Predicated region
    $region22: #{tpu_custom_call.1} parent=1 // pred_check
      _
    $region23: #{tpu_custom_call.1} parent=1 // pred_check_branch
      %211 = sbr.rel (0) target = $region25
    $region24: #{tpu_custom_call.1} parent=1 // pred_region
      _
    $region25: #{tpu_custom_call.1} parent=1 // pred_fallthru
      _
    %212 = vsyncpa [#allocation3], 1

</llo_original>
